<compile_context>
chip_gen: v6e
topology: v6e:2x2x1
jax: 0.10.0
libtpu: 0.0.40
codegen_flags: <defaults>
</compile_context>

<pallas_src>
import math

import jax
import jax.numpy as jnp
from jax.experimental import pallas as pl
from jax.experimental.pallas import tpu as pltpu


# ---------------------------------------------------------------------------
# Device / tiling helpers
# ---------------------------------------------------------------------------
def _default_vmem_limit():
  """~75% of physical VMEM (v5e/v6e: 128 MiB, v7x: 64 MiB); safe fallback."""
  try:
    info = pltpu.get_tpu_info()
    cap = getattr(info, "vmem_capacity_bytes", None)
    if cap:
      return min(int(cap) * 3 // 4, 100 * 1024 * 1024)
  except Exception:
    pass
  return 64 * 1024 * 1024


_VMEM_LIMIT = _default_vmem_limit()


def _pick_tile(dim: int, cap: int, gran: int) -> int:
  """Largest multiple of `gran` that divides `dim` and is <= cap; else full dim."""
  t = (min(cap, dim) // gran) * gran
  while t >= gran:
    if dim % t == 0:
      return t
    t -= gran
  return dim  # full-extent block is always legal


# ---------------------------------------------------------------------------
# Fused linear kernel: out = act(A @ W [+ bias]) [+ residual]
# (bf16 operands on the MXU, f32 accumulator in VMEM scratch)
# ---------------------------------------------------------------------------
def _make_linear_kernel(has_bias: bool, activation, has_residual: bool):
  def kernel(*refs):
    i = 0
    a_ref = refs[i]; i += 1
    w_ref = refs[i]; i += 1
    bias_ref = None
    res_ref = None
    if has_bias:
      bias_ref = refs[i]; i += 1
    if has_residual:
      res_ref = refs[i]; i += 1
    o_ref = refs[i]
    acc_ref = refs[i + 1]

    k = pl.program_id(2)

    @pl.when(k == 0)
    def _():
      acc_ref[...] = jnp.zeros_like(acc_ref)

    acc_ref[...] += jnp.dot(a_ref[...], w_ref[...],
                            preferred_element_type=jnp.float32)

    @pl.when(k == pl.num_programs(2) - 1)
    def _():
      out = acc_ref[...]
      if has_bias:
        out = out + bias_ref[...].astype(jnp.float32)
      if activation == "relu":
        out = jnp.maximum(out, 0.0)
      elif activation == "gelu":
        out = jax.nn.gelu(out, approximate=False)
      if has_residual:
        out = out + res_ref[...].astype(jnp.float32)
      o_ref[...] = out.astype(o_ref.dtype)

  return kernel


def linear(a, w, *, bias=None, residual=None, activation=None,
           tm_cap=1024, tn_cap=512, tk_cap=1024):
  """a: [M, K], w: [K, N] (already transposed nn.Linear weight)."""
  M, K = a.shape
  K2, N = w.shape
  assert K == K2
  gran_m = 16 if a.dtype == jnp.bfloat16 else 8
  tm = _pick_tile(M, tm_cap, gran_m)
  tn = _pick_tile(N, tn_cap, 128)
  tk = _pick_tile(K, tk_cap, 128)
  grid = (M // tm, N // tn, K // tk)

  in_specs = [
      pl.BlockSpec((tm, tk), lambda i, j, k: (i, k)),
      pl.BlockSpec((tk, tn), lambda i, j, k: (k, j)),
  ]
  args = [a, w]
  if bias is not None:
    in_specs.append(pl.BlockSpec((1, tn), lambda i, j, k: (0, j)))
    args.append(bias.reshape(1, N))
  if residual is not None:
    in_specs.append(pl.BlockSpec((tm, tn), lambda i, j, k: (i, j)))
    args.append(residual)

  kernel = _make_linear_kernel(bias is not None, activation, residual is not None)
  return pl.pallas_call(
      kernel,
      out_shape=jax.ShapeDtypeStruct((M, N), a.dtype),
      grid=grid,
      in_specs=in_specs,
      out_specs=pl.BlockSpec((tm, tn), lambda i, j, k: (i, j)),
      scratch_shapes=[pltpu.VMEM((tm, tn), jnp.float32)],
      compiler_params=pltpu.CompilerParams(
          dimension_semantics=("parallel", "parallel", "arbitrary"),
          vmem_limit_bytes=_VMEM_LIMIT),
  )(*args)


# ---------------------------------------------------------------------------
# LayerNorm kernel (over last dim of a flat [M, D] slab), f32 math
# ---------------------------------------------------------------------------
def _make_layernorm_kernel(eps: float):
  def kernel(x_ref, g_ref, b_ref, o_ref):
    x = x_ref[...].astype(jnp.float32)
    mu = jnp.mean(x, axis=-1, keepdims=True)
    var = jnp.mean(jnp.square(x - mu), axis=-1, keepdims=True)
    inv = jax.lax.rsqrt(var + eps)
    y = (x - mu) * inv * g_ref[...].astype(jnp.float32) + b_ref[...].astype(jnp.float32)
    o_ref[...] = y.astype(o_ref.dtype)
  return kernel


def layernorm(x, gamma, beta, eps=1e-6, tm_cap=1024):
  M, D = x.shape
  gran_m = 16 if x.dtype == jnp.bfloat16 else 8
  tm = _pick_tile(M, tm_cap, gran_m)
  return pl.pallas_call(
      _make_layernorm_kernel(eps),
      out_shape=jax.ShapeDtypeStruct((M, D), x.dtype),
      grid=(M // tm,),
      in_specs=[
          pl.BlockSpec((tm, D), lambda i: (i, 0)),
          pl.BlockSpec((1, D), lambda i: (0, 0)),   # gamma: VMEM-resident
          pl.BlockSpec((1, D), lambda i: (0, 0)),   # beta
      ],
      out_specs=pl.BlockSpec((tm, D), lambda i: (i, 0)),
      compiler_params=pltpu.CompilerParams(
          dimension_semantics=("parallel",),
          vmem_limit_bytes=_VMEM_LIMIT),
  )(x, gamma.reshape(1, D), beta.reshape(1, D))


# ---------------------------------------------------------------------------
# Per-(batch, head) scaled-dot-product attention kernel
# ---------------------------------------------------------------------------
def _make_attention_kernel(scale: float, causal: bool, has_mask: bool):
  def kernel(*refs):
    if has_mask:
      q_ref, k_ref, v_ref, m_ref, o_ref = refs
    else:
      q_ref, k_ref, v_ref, o_ref = refs
    q = q_ref[...]                        # (L, Dh), compute dtype (bf16)
    k = k_ref[...]                        # (S, Dh)
    v = v_ref[...]                        # (S, Dh)
    L, S = q.shape[0], k.shape[0]

    qs = q * scale                        # scale q (L*Dh) instead of scores (L*S)
    s = jax.lax.dot_general(qs, k, (((1,), (1,)), ((), ())),
                            preferred_element_type=jnp.float32)   # (L, S) f32
    if causal:
      row = jax.lax.broadcasted_iota(jnp.int32, (L, S), 0)
      col = jax.lax.broadcasted_iota(jnp.int32, (L, S), 1)
      s = jnp.where(col <= row, s, jnp.float32(-1e30))
    if has_mask:
      s = s + m_ref[...].astype(jnp.float32)

    m = jnp.max(s, axis=-1, keepdims=True)
    p = jnp.exp(s - m)
    denom = jnp.sum(p, axis=-1, keepdims=True)
    o = jnp.dot(p.astype(v.dtype), v, preferred_element_type=jnp.float32)
    # Normalize the (L, Dh) output with an EUP reciprocal instead of dividing (L, S).
    o = o * pl.reciprocal(denom, approx=True)
    o_ref[...] = o.astype(o_ref.dtype)
  return kernel


def _attention(q_in, k_in, v_in, *, B, H, Lq, S, Dh, scale, out_dtype,
               mask=None, causal=False):
  """q_in/k_in/v_in: (array, block_shape, index_map); grid (B, H), one head/step."""
  in_specs = [pl.BlockSpec(bs, im) for (_, bs, im) in (q_in, k_in, v_in)]
  args = [arr for (arr, _, _) in (q_in, k_in, v_in)]
  if mask is not None:
    in_specs.append(pl.BlockSpec((None, None, Lq, S), lambda b, h: (b, h, 0, 0)))
    args.append(mask)

  return pl.pallas_call(
      _make_attention_kernel(scale, causal, mask is not None),
      out_shape=jax.ShapeDtypeStruct((B, H, Lq, Dh), out_dtype),
      grid=(B, H),
      in_specs=in_specs,
      out_specs=pl.BlockSpec((None, None, Lq, Dh), lambda b, h: (b, h, 0, 0)),
      compiler_params=pltpu.CompilerParams(
          dimension_semantics=("parallel", "parallel"),
          vmem_limit_bytes=_VMEM_LIMIT),
  )(*args)


# ---------------------------------------------------------------------------
# Mask handling (matches MultiheadAttention: 3-D mask (B*H, L, S), bool -> -1e10)
# ---------------------------------------------------------------------------
def _prepare_mask(attn_mask, B, H, L, S):
  if attn_mask is None:
    return None
  assert attn_mask.shape == (B * H, L, S), (
      f"attn_mask must have shape {(B * H, L, S)}, got {attn_mask.shape}")
  if attn_mask.dtype == jnp.bool_:
    add = jnp.where(attn_mask, jnp.float32(-1e10), jnp.float32(0.0))
  else:
    add = attn_mask.astype(jnp.float32)
  return add.reshape(B, H, L, S)


# ---------------------------------------------------------------------------
# TransformerDecoderLayer forward
# ---------------------------------------------------------------------------
def transformer_decoder_layer_forward(tgt, memory, params, *, nhead,
                                      tgt_mask=None, memory_mask=None,
                                      tgt_is_causal=False,
                                      norm_first=True, layer_norm_eps=1e-6,
                                      activation="relu",
                                      decode=False, cache=None):
  """Eval-mode forward of TransformerDecoderLayer. Returns (out, cache)."""
  if decode:
    raise NotImplementedError("decode=True (KV-cache) path not implemented.")

  compute_dtype = params["self_in_proj_w"].dtype
  B, L, D = tgt.shape
  S = memory.shape[1]
  H = nhead
  assert D % H == 0
  Dh = D // H
  eps = layer_norm_eps
  scale = 1.0 / math.sqrt(Dh)

  x = tgt.astype(compute_dtype).reshape(B * L, D)          # lane-dense flat slab
  mem_flat = memory.astype(compute_dtype).reshape(B * S, D)

  self_mask = None if tgt_is_causal else _prepare_mask(tgt_mask, B, H, L, L)
  cross_mask = _prepare_mask(memory_mask, B, H, L, S)

  def _sa_block(y_flat, residual_flat):
    qkv = linear(y_flat, params["self_in_proj_w"])                   # [B*L, 3D]
    # One packed head-major transpose; q/k/v are indexed straight out of the
    # packed tensor by BlockSpecs (no jnp.split + per-tensor transposes).
    qkv_p = qkv.reshape(B, L, 3, H, Dh).transpose(0, 3, 2, 1, 4)     # (B, H, 3, L, Dh)
    blk = (None, None, None, L, Dh)
    attn = _attention(
        (qkv_p, blk, lambda b, h: (b, h, 0, 0, 0)),                  # q
        (qkv_p, blk, lambda b, h: (b, h, 1, 0, 0)),                  # k
        (qkv_p, blk, lambda b, h: (b, h, 2, 0, 0)),                  # v
        B=B, H=H, Lq=L, S=L, Dh=Dh, scale=scale, out_dtype=compute_dtype,
        mask=self_mask, causal=tgt_is_causal)
    merged = attn.transpose(0, 2, 1, 3).reshape(B * L, D)
    # out_proj fused with the residual add
    return linear(merged, params["self_out_proj_w"], residual=residual_flat)

  def _mha_block(y_flat, residual_flat):
    q = linear(y_flat, params["cross_q_proj_w"])                     # [B*L, D]
    kv = linear(mem_flat, params["cross_kv_proj_w"])                 # [B*S, 2D]
    q_p = q.reshape(B, L, H, Dh).transpose(0, 2, 1, 3)               # (B, H, L, Dh)
    kv_p = kv.reshape(B, S, 2, H, Dh).transpose(0, 3, 2, 1, 4)       # (B, H, 2, S, Dh)
    kv_blk = (None, None, None, S, Dh)
    attn = _attention(
        (q_p, (None, None, L, Dh), lambda b, h: (b, h, 0, 0)),
        (kv_p, kv_blk, lambda b, h: (b, h, 0, 0, 0)),                # k
        (kv_p, kv_blk, lambda b, h: (b, h, 1, 0, 0)),                # v
        B=B, H=H, Lq=L, S=S, Dh=Dh, scale=scale, out_dtype=compute_dtype,
        mask=cross_mask, causal=False)
    merged = attn.transpose(0, 2, 1, 3).reshape(B * L, D)
    return linear(merged, params["cross_out_proj_w"], residual=residual_flat)

  def _ff_block(y_flat, residual_flat):
    h = linear(y_flat, params["linear1_w"], bias=params["linear1_b"],
               activation=activation)
    return linear(h, params["linear2_w"], bias=params["linear2_b"],
                  residual=residual_flat)

  # Dropout layers are identity (eval mode).
  if norm_first:
    x = _sa_block(layernorm(x, params["norm1_g"], params["norm1_b"], eps), x)
    x = _mha_block(layernorm(x, params["norm2_g"], params["norm2_b"], eps), x)
    x = _ff_block(layernorm(x, params["norm3_g"], params["norm3_b"], eps), x)
  else:
    x = layernorm(_sa_block(x, x), params["norm1_g"], params["norm1_b"], eps)
    x = layernorm(_mha_block(x, x), params["norm2_g"], params["norm2_b"], eps)
    x = layernorm(_ff_block(x, x), params["norm3_g"], params["norm3_b"], eps)

  return x.reshape(B, L, D), cache


# ---------------------------------------------------------------------------
# Parameter init (weights stored transposed [in, out], bf16; biases/LN in f32)
# ---------------------------------------------------------------------------
def init_params(key, d_model, nhead, dim_feedforward, weight_dtype=jnp.bfloat16):
  del nhead
  ks = jax.random.split(key, 12)

  def xavier(k, shape):
    fan_in, fan_out = shape
    limit = math.sqrt(6.0 / (fan_in + fan_out))
    return jax.random.uniform(k, shape, jnp.float32, -limit, limit).astype(weight_dtype)

  f32 = jnp.float32
  return {
      "self_in_proj_w": xavier(ks[0], (d_model, 3 * d_model)),
      "self_out_proj_w": xavier(ks[1], (d_model, d_model)),
      "cross_q_proj_w": xavier(ks[2], (d_model, d_model)),
      "cross_kv_proj_w": xavier(ks[3], (d_model, 2 * d_model)),
      "cross_out_proj_w": xavier(ks[4], (d_model, d_model)),
      "linear1_w": xavier(ks[5], (d_model, dim_feedforward)),
      "linear1_b": 0.02 * jax.random.normal(ks[6], (dim_feedforward,), f32),
      "linear2_w": xavier(ks[7], (dim_feedforward, d_model)),
      "linear2_b": 0.02 * jax.random.normal(ks[8], (d_model,), f32),
      "norm1_g": 1.0 + 0.1 * jax.random.normal(ks[9], (d_model,), f32),
      "norm1_b": 0.1 * jax.random.normal(ks[10], (d_model,), f32),
      "norm2_g": jnp.ones((d_model,), f32),
      "norm2_b": jnp.zeros((d_model,), f32),
      "norm3_g": 1.0 + 0.05 * jax.random.normal(ks[11], (d_model,), f32),
      "norm3_b": jnp.zeros((d_model,), f32),
  }


# ---------------------------------------------------------------------------
# Pure-JAX reference with the same bf16 cast points (for correctness checking)
# ---------------------------------------------------------------------------
def _reference_forward(tgt, memory, params, *, nhead, tgt_mask=None,
                       memory_mask=None, norm_first=True, eps=1e-6,
                       activation="relu"):
  cd = params["self_in_proj_w"].dtype
  B, L, D = tgt.shape
  S = memory.shape[1]
  H = nhead
  Dh = D // H
  scale = 1.0 / math.sqrt(Dh)

  def ln(x, g, b):
    xf = x.astype(jnp.float32)
    mu = jnp.mean(xf, axis=-1, keepdims=True)
    var = jnp.mean(jnp.square(xf - mu), axis=-1, keepdims=True)
    return ((xf - mu) * jax.lax.rsqrt(var + eps) * g + b).astype(cd)

  def lin(a, w, bias=None, act=None, residual=None):
    out = jnp.dot(a, w, preferred_element_type=jnp.float32)
    if bias is not None:
      out = out + bias
    if act == "relu":
      out = jnp.maximum(out, 0.0)
    elif act == "gelu":
      out = jax.nn.gelu(out, approximate=False)
    if residual is not None:
      out = out + residual.astype(jnp.float32)
    return out.astype(cd)

  def heads(t, seq):
    return t.reshape(B, seq, H, Dh).transpose(0, 2, 1, 3)

  def sdpa(q, k, v, mask_add, lq):
    qs = q * scale
    s = jnp.einsum("bhld,bhsd->bhls", qs, k, preferred_element_type=jnp.float32)
    if mask_add is not None:
      s = s + mask_add
    m = jnp.max(s, axis=-1, keepdims=True)
    p = jnp.exp(s - m)
    den = jnp.sum(p, axis=-1, keepdims=True)
    o = jnp.einsum("bhls,bhsd->bhld", p.astype(cd), v,
                   preferred_element_type=jnp.float32)
    o = o / den
    return o.astype(cd).transpose(0, 2, 1, 3).reshape(B, lq, D)

  self_mask = _prepare_mask(tgt_mask, B, H, L, L)
  cross_mask = _prepare_mask(memory_mask, B, H, L, S)

  x = tgt.astype(cd)
  mem = memory.astype(cd)

  def sa(y, res):
    qkv = lin(y, params["self_in_proj_w"])
    q, k, v = jnp.split(qkv, 3, axis=-1)
    a = sdpa(heads(q, L), heads(k, L), heads(v, L), self_mask, L)
    return lin(a, params["self_out_proj_w"], residual=res)

  def mha(y, res):
    q = lin(y, params["cross_q_proj_w"])
    kv = lin(mem, params["cross_kv_proj_w"])
    k, v = jnp.split(kv, 2, axis=-1)
    a = sdpa(heads(q, L), heads(k, S), heads(v, S), cross_mask, L)
    return lin(a, params["cross_out_proj_w"], residual=res)

  def ff(y, res):
    h = lin(y, params["linear1_w"], bias=params["linear1_b"], act=activation)
    return lin(h, params["linear2_w"], bias=params["linear2_b"], residual=res)

  if norm_first:
    x = sa(ln(x, params["norm1_g"], params["norm1_b"]), x)
    x = mha(ln(x, params["norm2_g"], params["norm2_b"]), x)
    x = ff(ln(x, params["norm3_g"], params["norm3_b"]), x)
  else:
    x = ln(sa(x, x), params["norm1_g"], params["norm1_b"])
    x = ln(mha(x, x), params["norm2_g"], params["norm2_b"])
    x = ln(ff(x, x), params["norm3_g"], params["norm3_b"])
  return x


if __name__ == "__main__":
  # Small but lane-dense shapes (d_model multiple of 128).
  d_model = 128
  nhead = 4
  dim_feedforward = 256
  batch = 2
  tgt_len = 16
  src_len = 16

  key = jax.random.PRNGKey(0)
  k_tgt, k_mem, k_param = jax.random.split(key, 3)
  tgt = jax.random.normal(k_tgt, (batch, tgt_len, d_model), jnp.float32)
  memory = jax.random.normal(k_mem, (batch, src_len, d_model), jnp.float32)
  params = init_params(k_param, d_model, nhead, dim_feedforward,
                       weight_dtype=jnp.bfloat16)

  # Causal self-attention mask (True == not allowed to attend), shape (B*H, L, L).
  causal = jnp.triu(jnp.ones((tgt_len, tgt_len), dtype=jnp.bool_), k=1)
  tgt_mask = jnp.broadcast_to(causal, (batch * nhead, tgt_len, tgt_len))

  # Pre-norm path: causal mask generated in-kernel (no mask HBM traffic).
  out, cache = transformer_decoder_layer_forward(
      tgt, memory, params, nhead=nhead, tgt_is_causal=True, memory_mask=None,
      norm_first=True)
  out = jax.block_until_ready(out)
  ref = _reference_forward(tgt, memory, params, nhead=nhead,
                           tgt_mask=tgt_mask, memory_mask=None, norm_first=True)
  assert out.shape == (batch, tgt_len, d_model)
  assert jnp.allclose(out.astype(jnp.float32), ref.astype(jnp.float32),
                      atol=5e-2, rtol=5e-2), "mismatch on pre-norm (causal) path"

  # Post-norm path with an explicit (B*H, L, L) bool mask (exercises mask-DMA path).
  out2, _ = transformer_decoder_layer_forward(
      tgt, memory, params, nhead=nhead, tgt_mask=tgt_mask, norm_first=False)
  out2 = jax.block_until_ready(out2)
  ref2 = _reference_forward(tgt, memory, params, nhead=nhead,
                            tgt_mask=tgt_mask, norm_first=False)
  assert jnp.allclose(out2.astype(jnp.float32), ref2.astype(jnp.float32),
                      atol=5e-2, rtol=5e-2), "mismatch on post-norm path"

  print("KERNEL_OK")
</pallas_src>

<mosaic_0001>
module attributes {stable_mosaic.version = 11 : i64} {
  func.func @kernel(%arg0: i32, %arg1: memref<32x128xbf16, #tpu.memory_space<vmem>>, %arg2: memref<1x128xf32, #tpu.memory_space<vmem>>, %arg3: memref<1x128xf32, #tpu.memory_space<vmem>>, %arg4: memref<32x128xbf16, #tpu.memory_space<vmem>>) attributes {dimension_semantics = [#tpu.dimension_semantics<parallel>], iteration_bounds = array<i64: 1>, scalar_prefetch = 0 : i64, scratch_operands = 0 : i64, tpu.core_type = #tpu.core_type<tc>, window_params = [{transform_indices = @transform_0, window_bounds = array<i64: 32, 128>}, {pipeline_mode = #tpu.pipeline_mode<synchronous>, transform_indices = @transform_1, window_bounds = array<i64: 1, 128>}, {pipeline_mode = #tpu.pipeline_mode<synchronous>, transform_indices = @transform_2, window_bounds = array<i64: 1, 128>}, {transform_indices = @transform_3, window_bounds = array<i64: 32, 128>}]} {
    %c0 = arith.constant 0 : index
    %c0_0 = arith.constant 0 : index
    %0 = vector.load %arg1[%c0, %c0_0] : memref<32x128xbf16, #tpu.memory_space<vmem>>, vector<32x128xbf16>
    %1 = arith.extf %0 : vector<32x128xbf16> to vector<32x128xf32>
    %cst = arith.constant dense<0.000000e+00> : vector<32xf32>
    %2 = vector.multi_reduction <add>, %1, %cst [1] : vector<32x128xf32> to vector<32xf32>
    %3 = vector.shape_cast %2 : vector<32xf32> to vector<32x1xf32>
    %cst_1 = arith.constant 1.280000e+02 : f32
    %4 = vector.broadcast %cst_1 : f32 to vector<32x1xf32>
    %5 = arith.divf %3, %4 : vector<32x1xf32>
    %6 = vector.broadcast %5 : vector<32x1xf32> to vector<32x128xf32>
    %7 = arith.subf %1, %6 : vector<32x128xf32>
    %8 = arith.mulf %7, %7 : vector<32x128xf32>
    %cst_2 = arith.constant dense<0.000000e+00> : vector<32xf32>
    %9 = vector.multi_reduction <add>, %8, %cst_2 [1] : vector<32x128xf32> to vector<32xf32>
    %10 = vector.shape_cast %9 : vector<32xf32> to vector<32x1xf32>
    %cst_3 = arith.constant 1.280000e+02 : f32
    %11 = vector.broadcast %cst_3 : f32 to vector<32x1xf32>
    %12 = arith.divf %10, %11 : vector<32x1xf32>
    %cst_4 = arith.constant 9.99999997E-7 : f32
    %13 = vector.broadcast %cst_4 : f32 to vector<32x1xf32>
    %14 = arith.addf %12, %13 : vector<32x1xf32>
    %15 = math.rsqrt %14 : vector<32x1xf32>
    %16 = vector.broadcast %5 : vector<32x1xf32> to vector<32x128xf32>
    %17 = arith.subf %1, %16 : vector<32x128xf32>
    %18 = vector.broadcast %15 : vector<32x1xf32> to vector<32x128xf32>
    %19 = arith.mulf %17, %18 : vector<32x128xf32>
    %c0_5 = arith.constant 0 : index
    %c0_6 = arith.constant 0 : index
    %20 = vector.load %arg2[%c0_5, %c0_6] : memref<1x128xf32, #tpu.memory_space<vmem>>, vector<1x128xf32>
    %21 = vector.broadcast %20 : vector<1x128xf32> to vector<32x128xf32>
    %22 = arith.mulf %19, %21 : vector<32x128xf32>
    %c0_7 = arith.constant 0 : index
    %c0_8 = arith.constant 0 : index
    %23 = vector.load %arg3[%c0_7, %c0_8] : memref<1x128xf32, #tpu.memory_space<vmem>>, vector<1x128xf32>
    %24 = vector.broadcast %23 : vector<1x128xf32> to vector<32x128xf32>
    %25 = arith.addf %22, %24 : vector<32x128xf32>
    %26 = arith.truncf %25 : vector<32x128xf32> to vector<32x128xbf16>
    %c0_9 = arith.constant 0 : index
    %c0_10 = arith.constant 0 : index
    %27 = vector.load %arg4[%c0_9, %c0_10] : memref<32x128xbf16, #tpu.memory_space<vmem>>, vector<32x128xbf16>
    tpu.vector_store %arg4[%c0_9, %c0_10], %26 {strides = array<i32>} : memref<32x128xbf16, #tpu.memory_space<vmem>>, vector<32x128xbf16>,
    return
  }
  func.func @transform_0(%arg0: i32) -> (i32, i32) {
    %c0_i32 = arith.constant 0 : i32
    %c0_i32_0 = arith.constant 0 : i32
    return %arg0, %c0_i32 : i32, i32
  }
  func.func @transform_1(%arg0: i32) -> (i32, i32) {
    %c0_i32 = arith.constant 0 : i32
    %c0_i32_0 = arith.constant 0 : i32
    %c0_i32_1 = arith.constant 0 : i32
    return %c0_i32, %c0_i32_0 : i32, i32
  }
  func.func @transform_2(%arg0: i32) -> (i32, i32) {
    %c0_i32 = arith.constant 0 : i32
    %c0_i32_0 = arith.constant 0 : i32
    %c0_i32_1 = arith.constant 0 : i32
    return %c0_i32, %c0_i32_0 : i32, i32
  }
  func.func @transform_3(%arg0: i32) -> (i32, i32) {
    %c0_i32 = arith.constant 0 : i32
    %c0_i32_0 = arith.constant 0 : i32
    return %arg0, %c0_i32 : i32, i32
  }
}

</mosaic_0001>

<llo_original>
// kernel: tpu_custom_call.1
$region0: #{tpu_custom_call.1}
  #allocation0 [shape = 'u32[]', space=smem, size = 0x4, offset = 0x4, fixed_abs, tag = 'smem constant byte address 0x4 - core index']
  #allocation1 [shape = 'u32[144,128]{1,0:T(1,128)}', space=vmem, size = 0x12000, scoped, tag = 'internal scratch']
  %s0 = inlined_call_operand.hbm [shape: bf16[32,128], index: 0, kind: input, shape index: {}]
  %s1 = inlined_call_operand.vmem [shape: f32[1,128], index: 1, kind: input, shape index: {}]
  %s2 = inlined_call_operand.vmem [shape: f32[1,128], index: 2, kind: input, shape index: {}]
  %s3 = inlined_call_operand.hbm [shape: bf16[32,128], index: 3, kind: output, shape index: {}]
  %s4 = sld [smem:[#allocation0]]
  $region26: #{tpu_custom_call.1} parent=0
    _
  %s6 = ssub.s32 1, %s4
  %s7 = scalar_select 0, %s6, %s4
  $region1: #{tpu_custom_call.1} parent=0
    #allocation2 [shape = 'u8[8192]{0}', space=vmem, size = 0x2000, scoped, tag = 'input window, operand 0, single buffered']
    #allocation3 [shape = 's32[1]{0}', space=sflag, size = 0x4, scoped, tag = 'scoped memory for tpu_custom_call.1']
    #allocation4 [shape = 's32[1]{0}', space=sflag, size = 0x4, scoped, tag = 'scoped memory for tpu_custom_call.1']
    #allocation5 [shape = 'u8[8192]{0}', space=vmem, size = 0x2000, scoped, tag = 'output window, operand 0, single buffered']
    %8 = vsyncpa [#allocation3], 0
    %9 = vsyncpa [#allocation4], 0
    // Predicated region
    $region2: #{tpu_custom_call.1} parent=1 // pred_check
      _
    $region3: #{tpu_custom_call.1} parent=1 // pred_check_branch
      %11 = sbr.rel (0) target = $region5
    $region4: #{tpu_custom_call.1} parent=1 // pred_region
      %s13 = ssub.s32 256, 256
      %14 = vsyncadd [#allocation3], %s13
      %s15 = sshll.u32 [#allocation2], 4
      %s16 = int_to_ptr.vmem [resolvable:$true] %s15
      %21 = dma.hbm_to_vmem [thread:$0]  %s0, 256, %s16, [#allocation3], 64, 64, 4
    $region5: #{tpu_custom_call.1} parent=1 // pred_fallthru
      _
    // Predicated region
    $region6: #{tpu_custom_call.1} parent=1 // pred_check
      _
    $region7: #{tpu_custom_call.1} parent=1 // pred_check_branch
      %23 = sbr.rel (0) target = $region9
    $region8: #{tpu_custom_call.1} parent=1 // pred_region
      _
    $region9: #{tpu_custom_call.1} parent=1 // pred_fallthru
      _
    // Predicated region
    $region10: #{tpu_custom_call.1} parent=1 // pred_check
      _
    $region11: #{tpu_custom_call.1} parent=1 // pred_check_branch
      %25 = sbr.rel (0) target = $region13
    $region12: #{tpu_custom_call.1} parent=1 // pred_region
      _
    $region13: #{tpu_custom_call.1} parent=1 // pred_fallthru
      _
    // Predicated region
    $region14: #{tpu_custom_call.1} parent=1 // pred_check
      _
    $region15: #{tpu_custom_call.1} parent=1 // pred_check_branch
      %27 = sbr.rel (0) target = $region17
    $region16: #{tpu_custom_call.1} parent=1 // pred_region
      %28 = dma.done [#allocation3], 256
    $region17: #{tpu_custom_call.1} parent=1 // pred_fallthru
      _
    %v29 = vld [vmem:[#allocation2] sm:$0xf]
    %v30 = vld [vmem:[#allocation2 + $0x4] sm:$0xf]
    %v31 = vld [vmem:[#allocation2 + $0x8] sm:$0xf]
    %v32 = vld [vmem:[#allocation2 + $0xc] sm:$0xf]
    %v33 = vunpack.c.l.bf16 %v29
    %v34 = vunpack.c.l.bf16 %v30
    %v35 = vunpack.c.l.bf16 %v31
    %v36 = vunpack.c.l.bf16 %v32
    %37 = vadd.xlane.f32.xlu0 %v33
    %v38 = vpop.xlane.xlu0 %37
    %39 = vadd.xlane.f32.xlu0 %v34
    %v40 = vpop.xlane.xlu0 %39
    %41 = vadd.xlane.f32.xlu0 %v35
    %v42 = vpop.xlane.xlu0 %41
    %43 = vadd.xlane.f32.xlu0 %v36
    %v44 = vpop.xlane.xlu0 %43
    %v45 = vrcp.pop 128.0
    %v46 = vmul.f32 %v38, %v45
    %v47 = vmul.f32 %v40, %v45
    %v48 = vmul.f32 %v42, %v45
    %v49 = vmul.f32 %v44, %v45
    %v50 = vsub.f32 %v33, %v46
    %v51 = vsub.f32 %v34, %v47
    %v52 = vsub.f32 %v35, %v48
    %v53 = vsub.f32 %v36, %v49
    %v54 = vmul.f32 %v50, %v50
    %v55 = vmul.f32 %v51, %v51
    %v56 = vmul.f32 %v52, %v52
    %v57 = vmul.f32 %v53, %v53
    %58 = vadd.xlane.f32.xlu0 %v54
    %v59 = vpop.xlane.xlu0 %58
    %60 = vadd.xlane.f32.xlu0 %v55
    %v61 = vpop.xlane.xlu0 %60
    %62 = vadd.xlane.f32.xlu0 %v56
    %v63 = vpop.xlane.xlu0 %62
    %64 = vadd.xlane.f32.xlu0 %v57
    %v65 = vpop.xlane.xlu0 %64
    %v66 = vmul.f32 %v59, %v45
    %v67 = vmul.f32 %v61, %v45
    %v68 = vmul.f32 %v63, %v45
    %v69 = vmul.f32 %v65, %v45
    %v70 = vadd.f32 %v66, 1e-06
    %v71 = vadd.f32 %v67, 1e-06
    %v72 = vadd.f32 %v68, 1e-06
    %v73 = vadd.f32 %v69, 1e-06
    %v74 = vrsqrt.pop %v70
    %v75 = vrsqrt.pop %v71
    %v76 = vrsqrt.pop %v72
    %v77 = vrsqrt.pop %v73
    %v78 = vmul.f32 %v50, %v74
    %v79 = vmul.f32 %v51, %v75
    %v80 = vmul.f32 %v52, %v76
    %v81 = vmul.f32 %v53, %v77
    %v82 = vld [vmem:[%s1] sm:$0x1]
    %v84 = vlaneseq
    %v85 = vshrl.u32 %v84, 7
    %v86 = vsub.s32 0, %v85
    %v87 = vrot.slane %v82, %v86
    %v89 = vmul.f32 %v78, %v87
    %v90 = vmul.f32 %v79, %v87
    %v91 = vmul.f32 %v80, %v87
    %v92 = vmul.f32 %v81, %v87
    %v93 = vld [vmem:[%s2] sm:$0x1]
    %v95 = vlaneseq
    %v96 = vshrl.u32 %v95, 7
    %v97 = vsub.s32 0, %v96
    %v98 = vrot.slane %v93, %v97
    %v100 = vadd.f32 %v89, %v98
    %v101 = vadd.f32 %v90, %v98
    %v102 = vadd.f32 %v91, %v98
    %v103 = vadd.f32 %v92, %v98
    %v104 = vpack.c.bf16 %v101, %v100
    %v105 = vpack.c.bf16 %v103, %v102
    %v108 = vunpack.c.l.b16 %v104
    %v109 = vunpack.c.h.b16 %v104
    %v110 = vunpack.c.l.b16 %v105
    %v111 = vunpack.c.h.b16 %v105
    %v112 = vpack.c.b16 %v108, %v108
    %v113 = vpack.c.b16 %v109, %v109
    %v114 = vpack.c.b16 %v110, %v110
    %v115 = vpack.c.b16 %v111, %v111
    %120 = vst [vmem:[#allocation5] sm:$0xf] %v112
    %121 = vst [vmem:[#allocation5 + $0x4] sm:$0xf] %v113
    %122 = vst [vmem:[#allocation5 + $0x8] sm:$0xf] %v114
    %123 = vst [vmem:[#allocation5 + $0xc] sm:$0xf] %v115
    // Predicated region
    $region18: #{tpu_custom_call.1} parent=1 // pred_check
      _
    $region19: #{tpu_custom_call.1} parent=1 // pred_check_branch
      %125 = sbr.rel (0) target = $region21
    $region20: #{tpu_custom_call.1} parent=1 // pred_region
      %s127 = ssub.s32 256, 256
      %128 = vsyncadd [#allocation4], %s127
      %s129 = sshll.u32 [#allocation5], 4
      %s130 = int_to_ptr.vmem [resolvable:$true] %s129
      %135 = dma.vmem_to_hbm [thread:$0]  %s130, 256, %s3, [#allocation4], 64, 64, 4
    $region21: #{tpu_custom_call.1} parent=1 // pred_fallthru
      _
    // Predicated region
    $region22: #{tpu_custom_call.1} parent=1 // pred_check
      _
    $region23: #{tpu_custom_call.1} parent=1 // pred_check_branch
      %137 = sbr.rel (0) target = $region25
    $region24: #{tpu_custom_call.1} parent=1 // pred_region
      %138 = dma.done [#allocation4], 256
    $region25: #{tpu_custom_call.1} parent=1 // pred_fallthru
      _
    %139 = vsyncpa [#allocation3], 1
    %140 = vsyncpa [#allocation4], 1

</llo_original>
